<compile_context>
chip_gen: v5e
topology: v5e:2x2
jax: 0.10.0
libtpu: 0.0.40
codegen_flags: <defaults>
</compile_context>

<pallas_src>
import jax
import jax.numpy as jnp
from jax.experimental import pallas as pl
from jax.experimental.pallas import tpu as pltpu


def _round_up(x, m):
    return (x + m - 1) // m * m


# ---------------------------------------------------------------------------
# Kernel 1: per-row L2 normalization of the weight (over the dimout axis),
# cast to bf16 for the MXU.  Matches `weight / torch.norm(weight, dim=-1)`.
# ---------------------------------------------------------------------------
def _weight_rownorm_kernel(w_ref, wn_ref):
    w = w_ref[...].astype(jnp.float32)                    # (rt, dout_pad)
    ssq = jnp.sum(w * w, axis=-1, keepdims=True)          # row sum of squares (f32)
    # No eps, to match the PyTorch module exactly (zero row -> nan, same as torch).
    wn_ref[...] = (w * jax.lax.rsqrt(ssq)).astype(wn_ref.dtype)


# ---------------------------------------------------------------------------
# Kernel 2: feat row-norm (f32 rsqrt, exp(t) folded in) + bf16 MXU matmul.
# ---------------------------------------------------------------------------
def _cosine_matmul_kernel(t_ref, feat_ref, wn_ref, out_ref):
    feat = feat_ref[...]                                   # (tm, dimin) f32
    ssq = jnp.sum(feat * feat, axis=-1, keepdims=True)     # (tm, 1) f32
    # exp(t) folded into the per-row normalization factor: no post-matmul scaling pass.
    scale = jnp.exp(t_ref[0]) * jax.lax.rsqrt(ssq)
    feat_n = (feat * scale).astype(wn_ref.dtype)           # bf16 operands for the MXU
    out_ref[...] = jnp.dot(feat_n, wn_ref[...],
                           preferred_element_type=jnp.float32)


def cosine_classifier(feat, weight, t):
    """feat: (B, dimin), weight: (dimin, dimout), t: scalar. Returns (B, dimout) f32."""
    B, dimin = feat.shape
    dimin_w, dimout = weight.shape
    assert dimin == dimin_w, "feat / weight inner-dim mismatch"

    feat = feat.astype(jnp.float32)
    weight = weight.astype(jnp.float32)

    # ---- TPU-friendly padding: lane-dense dimout tiles, sublane-aligned batch.
    dout_pad = _round_up(dimout, 128)
    tn = dout_pad if dout_pad <= 512 else 512              # output tile lane width (mult of 128)
    dout_pad = _round_up(dout_pad, tn)

    b_pad = _round_up(B, 8)
    tm = b_pad if b_pad <= 256 else 256
    b_pad = _round_up(b_pad, tm)

    feat_p = feat if b_pad == B else jnp.pad(feat, ((0, b_pad - B), (0, 0)))
    # Zero-padding extra dimout columns does not change the per-row L2 norms.
    w_p = weight if dout_pad == dimout else jnp.pad(
        weight, ((0, 0), (0, dout_pad - dimout)))

    # ---- Kernel 1: normalize the weight rows once, emit bf16 for the MXU.
    rt = dimin if (dimin <= 256 or dimin % 8 != 0) else 256
    w_n = pl.pallas_call(
        _weight_rownorm_kernel,
        out_shape=jax.ShapeDtypeStruct((dimin, dout_pad), jnp.bfloat16),
        grid=(pl.cdiv(dimin, rt),),
        in_specs=[pl.BlockSpec((rt, dout_pad), lambda i: (i, 0))],
        out_specs=pl.BlockSpec((rt, dout_pad), lambda i: (i, 0)),
        compiler_params=pltpu.CompilerParams(
            dimension_semantics=("parallel",)),
    )(w_p)

    # ---- Kernel 2: tiled cosine matmul over (B tiles, dimout tiles).
    t_arr = jnp.asarray(t, jnp.float32).reshape(1)
    grid = (b_pad // tm, dout_pad // tn)

    cost = pl.CostEstimate(
        flops=2 * b_pad * dimin * dout_pad + 3 * b_pad * dimin,
        bytes_accessed=(4 * b_pad * dimin          # feat (f32)
                        + 2 * dimin * dout_pad     # normalized weight (bf16)
                        + 4 * b_pad * dout_pad),   # output (f32)
        transcendentals=b_pad + 1,
    )

    out_p = pl.pallas_call(
        _cosine_matmul_kernel,
        out_shape=jax.ShapeDtypeStruct((b_pad, dout_pad), jnp.float32),
        grid=grid,
        in_specs=[
            pl.BlockSpec(memory_space=pltpu.SMEM),            # t, (1,) scalar in SMEM
            pl.BlockSpec((tm, dimin), lambda i, j: (i, 0)),    # feat tile, full dimin
            pl.BlockSpec((dimin, tn), lambda i, j: (0, j)),    # weight: dimout tile
        ],
        out_specs=pl.BlockSpec((tm, tn), lambda i, j: (i, j)),
        compiler_params=pltpu.CompilerParams(
            dimension_semantics=("parallel", "parallel"),      # both TCs on v7x
            vmem_limit_bytes=48 * 1024 * 1024,                 # safe on v5e/v6e/v7x
        ),
        cost_estimate=cost,
    )(t_arr, feat_p, w_n)

    # Padded rows/cols (NaN rows from 0-norm padded feat, zero padded classes) are sliced away.
    return out_p[:B, :dimout]


def cosine_classifier_ref(feat, weight, t):
    feat_n = feat / jnp.linalg.norm(feat, axis=-1, keepdims=True)
    w_n = weight / jnp.linalg.norm(weight, axis=-1, keepdims=True)
    return jnp.exp(t) * (feat_n @ w_n)


if __name__ == "__main__":
    key = jax.random.PRNGKey(0)
    k_feat, k_w = jax.random.split(key)

    # --- module-sized toy shapes (single-tile path after padding) ---
    B, dimin, dimout = 2, 32, 8
    feat = jax.random.normal(k_feat, (B, dimin), dtype=jnp.float32)
    weight = jax.random.normal(k_w, (dimin, dimout), dtype=jnp.float32)
    t = jnp.float32(0.0)

    out = cosine_classifier(feat, weight, t)
    out = jax.block_until_ready(out)
    ref = cosine_classifier_ref(feat, weight, t)
    assert out.shape == (B, dimout)
    # bf16 MXU operands (f32 accumulation) -> compare at bf16-level tolerance.
    assert jnp.allclose(out, ref, atol=2e-2, rtol=2e-2), "mismatch vs reference (small)"

    # --- a slightly larger case that exercises the multi-tile dimout grid + padding ---
    B2, dimin2, dimout2 = 8, 64, 600
    k3, k4 = jax.random.split(k_w)
    feat2 = jax.random.normal(k3, (B2, dimin2), dtype=jnp.float32)
    weight2 = jax.random.normal(k4, (dimin2, dimout2), dtype=jnp.float32)
    t2 = jnp.float32(0.3)

    out2 = jax.block_until_ready(cosine_classifier(feat2, weight2, t2))
    ref2 = cosine_classifier_ref(feat2, weight2, t2)
    assert out2.shape == (B2, dimout2)
    assert jnp.allclose(out2, ref2, atol=2e-2, rtol=2e-2), "mismatch vs reference (tiled)"

    print("KERNEL_OK")
</pallas_src>

<mosaic_0001>
module attributes {stable_mosaic.version = 11 : i64} {
  func.func @_weight_rownorm_kernel(%arg0: i32, %arg1: memref<32x128xf32, #tpu.memory_space<vmem>>, %arg2: memref<32x128xbf16, #tpu.memory_space<vmem>>) attributes {dimension_semantics = [#tpu.dimension_semantics<parallel>], iteration_bounds = array<i64: 1>, scalar_prefetch = 0 : i64, scratch_operands = 0 : i64, tpu.core_type = #tpu.core_type<tc>, window_params = [{transform_indices = @transform_0, window_bounds = array<i64: 32, 128>}, {transform_indices = @transform_1, window_bounds = array<i64: 32, 128>}]} {
    %c0 = arith.constant 0 : index
    %c0_0 = arith.constant 0 : index
    %0 = vector.load %arg1[%c0, %c0_0] : memref<32x128xf32, #tpu.memory_space<vmem>>, vector<32x128xf32>
    %1 = arith.mulf %0, %0 : vector<32x128xf32>
    %cst = arith.constant dense<0.000000e+00> : vector<32xf32>
    %2 = vector.multi_reduction <add>, %1, %cst [1] : vector<32x128xf32> to vector<32xf32>
    %3 = vector.shape_cast %2 : vector<32xf32> to vector<32x1xf32>
    %4 = math.rsqrt %3 : vector<32x1xf32>
    %5 = vector.broadcast %4 : vector<32x1xf32> to vector<32x128xf32>
    %6 = arith.mulf %0, %5 : vector<32x128xf32>
    %7 = arith.truncf %6 : vector<32x128xf32> to vector<32x128xbf16>
    %c0_1 = arith.constant 0 : index
    %c0_2 = arith.constant 0 : index
    %8 = vector.load %arg2[%c0_1, %c0_2] : memref<32x128xbf16, #tpu.memory_space<vmem>>, vector<32x128xbf16>
    tpu.vector_store %arg2[%c0_1, %c0_2], %7 {strides = array<i32>} : memref<32x128xbf16, #tpu.memory_space<vmem>>, vector<32x128xbf16>,
    return
  }
  func.func @transform_0(%arg0: i32) -> (i32, i32) {
    %c0_i32 = arith.constant 0 : i32
    %c0_i32_0 = arith.constant 0 : i32
    return %arg0, %c0_i32 : i32, i32
  }
  func.func @transform_1(%arg0: i32) -> (i32, i32) {
    %c0_i32 = arith.constant 0 : i32
    %c0_i32_0 = arith.constant 0 : i32
    return %arg0, %c0_i32 : i32, i32
  }
}

</mosaic_0001>

<llo_original>
// kernel: tpu_custom_call.1
$region0: #{tpu_custom_call.1}
  #allocation0 [shape = 'u32[]', space=smem, size = 0x4, offset = 0x4, fixed_abs, tag = 'smem constant byte address 0x4 - core index']
  #allocation1 [shape = 'u32[72,128]{1,0:T(1,128)}', space=vmem, size = 0x9000, scoped, tag = 'internal scratch']
  %s0 = inlined_call_operand.hbm [shape: f32[32,128], index: 0, kind: input, shape index: {}]
  %s1 = inlined_call_operand.hbm [shape: bf16[32,128], index: 1, kind: output, shape index: {}]
  %s2 = sld [smem:[#allocation0]]
  $region18: #{tpu_custom_call.1} parent=0
    _
  %s4 = ssub.s32 1, %s2
  %s5 = scalar_select 0, %s4, %s2
  $region1: #{tpu_custom_call.1} parent=0
    #allocation2 [shape = 'u8[16384]{0}', space=vmem, size = 0x4000, scoped, tag = 'input window, operand 0, single buffered']
    #allocation3 [shape = 's32[1]{0}', space=sflag, size = 0x4, scoped, tag = 'scoped memory for tpu_custom_call.1']
    #allocation4 [shape = 's32[1]{0}', space=sflag, size = 0x4, scoped, tag = 'scoped memory for tpu_custom_call.1']
    #allocation5 [shape = 'u8[8192]{0}', space=vmem, size = 0x2000, scoped, tag = 'output window, operand 0, single buffered']
    %6 = vsyncpa [#allocation3], 0
    %7 = vsyncpa [#allocation4], 0
    // Predicated region
    $region2: #{tpu_custom_call.1} parent=1 // pred_check
      _
    $region3: #{tpu_custom_call.1} parent=1 // pred_check_branch
      %9 = sbr.rel (0) target = $region5
    $region4: #{tpu_custom_call.1} parent=1 // pred_region
      %11 = vsyncadd [#allocation3], 0
      %s12 = sshll.u32 %s0, 4
      %s13 = int_to_ptr.hbm [resolvable:$true] %s12
      %s14 = sshll.u32 [#allocation2], 4
      %s15 = int_to_ptr.vmem [resolvable:$true] %s14
      %20 = dma.hbm_to_vmem [thread:$0]  %s13, 512, %s15, [#allocation3], 128, 128, 8
    $region5: #{tpu_custom_call.1} parent=1 // pred_fallthru
      _
    // Predicated region
    $region6: #{tpu_custom_call.1} parent=1 // pred_check
      _
    $region7: #{tpu_custom_call.1} parent=1 // pred_check_branch
      %22 = sbr.rel (0) target = $region9
    $region8: #{tpu_custom_call.1} parent=1 // pred_region
      %24 = dma.done [#allocation3], 512
    $region9: #{tpu_custom_call.1} parent=1 // pred_fallthru
      _
    %v25 = vld [vmem:[#allocation2] sm:$0xff]
    %v26 = vld [vmem:[#allocation2 + $0x8] sm:$0xff]
    %v27 = vld [vmem:[#allocation2 + $0x10] sm:$0xff]
    %v28 = vld [vmem:[#allocation2 + $0x18] sm:$0xff]
    %v29 = vmul.f32 %v25, %v25
    %v30 = vmul.f32 %v26, %v26
    %v31 = vmul.f32 %v27, %v27
    %v32 = vmul.f32 %v28, %v28
    %33 = vadd.xlane.f32.xlu0 %v29
    %v34 = vpop.xlane.xlu0 %33
    %35 = vadd.xlane.f32.xlu0 %v30
    %v36 = vpop.xlane.xlu0 %35
    %37 = vadd.xlane.f32.xlu0 %v31
    %v38 = vpop.xlane.xlu0 %37
    %39 = vadd.xlane.f32.xlu0 %v32
    %v40 = vpop.xlane.xlu0 %39
    %v41 = vrsqrt.pop %v34
    %v42 = vmul.f32 %v41, %v34
    %v43 = vmul.f32 %v42, %v41
    %v44 = vmul.f32 0.5, %v43
    %v45 = vsub.f32 1.5, %v44
    %v46 = vmul.f32 %v41, %v45
    %vm47 = vweird.f32 %v34
    %vm48 = vweird.f32 %v41
    %vm49 = vmor %vm47, %vm48
    %v50 = vsel %vm49, %v41, %v46
    %v51 = vrsqrt.pop %v36
    %v52 = vmul.f32 %v51, %v36
    %v53 = vmul.f32 %v52, %v51
    %v54 = vmul.f32 0.5, %v53
    %v55 = vsub.f32 1.5, %v54
    %v56 = vmul.f32 %v51, %v55
    %vm57 = vweird.f32 %v36
    %vm58 = vweird.f32 %v51
    %vm59 = vmor %vm57, %vm58
    %v60 = vsel %vm59, %v51, %v56
    %v61 = vrsqrt.pop %v38
    %v62 = vmul.f32 %v61, %v38
    %v63 = vmul.f32 %v62, %v61
    %v64 = vmul.f32 0.5, %v63
    %v65 = vsub.f32 1.5, %v64
    %v66 = vmul.f32 %v61, %v65
    %vm67 = vweird.f32 %v38
    %vm68 = vweird.f32 %v61
    %vm69 = vmor %vm67, %vm68
    %v70 = vsel %vm69, %v61, %v66
    %v71 = vrsqrt.pop %v40
    %v72 = vmul.f32 %v71, %v40
    %v73 = vmul.f32 %v72, %v71
    %v74 = vmul.f32 0.5, %v73
    %v75 = vsub.f32 1.5, %v74
    %v76 = vmul.f32 %v71, %v75
    %vm77 = vweird.f32 %v40
    %vm78 = vweird.f32 %v71
    %vm79 = vmor %vm77, %vm78
    %v80 = vsel %vm79, %v71, %v76
    %v81 = vmul.f32 %v25, %v50
    %v82 = vmul.f32 %v26, %v60
    %v83 = vmul.f32 %v27, %v70
    %v84 = vmul.f32 %v28, %v80
    %v85 = vpack.c.bf16 %v81, %v81
    %v86 = vpack.c.bf16 %v82, %v82
    %v87 = vpack.c.bf16 %v83, %v83
    %v88 = vpack.c.bf16 %v84, %v84
    %89 = vst [vmem:[#allocation5] sm:$0xf] %v85
    %90 = vst [vmem:[#allocation5 + $0x4] sm:$0xf] %v86
    %91 = vst [vmem:[#allocation5 + $0x8] sm:$0xf] %v87
    %92 = vst [vmem:[#allocation5 + $0xc] sm:$0xf] %v88
    // Predicated region
    $region10: #{tpu_custom_call.1} parent=1 // pred_check
      _
    $region11: #{tpu_custom_call.1} parent=1 // pred_check_branch
      %94 = sbr.rel (0) target = $region13
    $region12: #{tpu_custom_call.1} parent=1 // pred_region
      %96 = vsyncadd [#allocation4], 0
      %s97 = sshll.u32 [#allocation5], 4
      %s98 = int_to_ptr.vmem [resolvable:$true] %s97
      %s99 = sshll.u32 %s1, 4
      %s100 = int_to_ptr.hbm [resolvable:$true] %s99
      %105 = dma.vmem_to_hbm [thread:$0]  %s98, 256, %s100, [#allocation4], 64, 64, 4
    $region13: #{tpu_custom_call.1} parent=1 // pred_fallthru
      _
    // Predicated region
    $region14: #{tpu_custom_call.1} parent=1 // pred_check
      _
    $region15: #{tpu_custom_call.1} parent=1 // pred_check_branch
      %107 = sbr.rel (0) target = $region17
    $region16: #{tpu_custom_call.1} parent=1 // pred_region
      %109 = dma.done [#allocation4], 256
    $region17: #{tpu_custom_call.1} parent=1 // pred_fallthru
      _
    %110 = vsyncpa [#allocation3], 1
    %111 = vsyncpa [#allocation4], 1

</llo_original>
